<compile_context>
chip_gen: v7x
topology: tpu7x:2x2x1
jax: 0.10.0
libtpu: 0.0.40
codegen_flags: <defaults>
</compile_context>

<pallas_src>
import functools

import jax
import jax.numpy as jnp
from jax import lax
from jax.experimental import pallas as pl
from jax.experimental.pallas import tpu as pltpu


# ---------------------------------------------------------------------------
# Hardware introspection helpers (generation-aware VMEM / dtype choices).
# ---------------------------------------------------------------------------
def _device_kind():
    try:
        return jax.devices()[0].device_kind.lower()
    except Exception:
        return ""


def _vmem_capacity_bytes():
    try:
        cap = int(pltpu.get_tpu_info().vmem_capacity_bytes)
        if cap > 0:
            return cap
    except Exception:
        pass
    kind = _device_kind()
    if "v5" in kind or "v6" in kind:
        return 128 * 1024 * 1024
    # Conservative default (v7x has 64 MiB per TensorCore).
    return 64 * 1024 * 1024


def _default_bf16_exp():
    # v2-v5 have no bf16 EUP; bf16 exp only pays off (and is intended) on v6e+.
    kind = _device_kind()
    for old in ("v2", "v3", "v4", "v5"):
        if old in kind:
            return False
    return True


# ---------------------------------------------------------------------------
# Tiling plan: pick the largest Lk tile whose *full* per-step VMEM footprint
# (double-buffered blocks + accumulator + f32 in-kernel temporaries) fits the
# per-generation budget.  Pads Lk to a 128 multiple when tiling a ragged Lk.
# ---------------------------------------------------------------------------
def _plan_tiling(Lk, Lq, Dk, Dv, in_itemsize, attn_itemsize, return_attn,
                 has_mask, mask_resident, budget, key_tile=None):
    def usage(tlk, lk_resident):
        b = 2 * Dk * Lq * in_itemsize          # q block (double-buffered)
        b += 2 * Dk * tlk * in_itemsize        # k block
        b += 2 * Dv * tlk * in_itemsize        # v block
        b += 2 * Dv * Lq * in_itemsize         # out block
        if has_mask:
            b += 2 * (lk_resident if mask_resident else tlk) * Lq  # int8 mask
        if return_attn:
            b += 2 * tlk * Lq * attn_itemsize  # attn out block
        b += Dv * Lq * 4                       # f32 accumulator scratch
        b += 3 * tlk * Lq * 4                  # f32 temporaries: logits, e, attn
        return b

    if key_tile is not None:
        tlk = int(key_tile)
        if tlk < Lk and tlk % 128 != 0:
            raise ValueError("key_tile must be a multiple of 128 or >= Lk")
        lk_pad = -(-Lk // tlk) * tlk
        return tlk, lk_pad

    # Single full-Lk tile when it comfortably fits (fewest grid steps).
    if Lk <= 2048 and usage(Lk, Lk) <= budget:
        return Lk, Lk

    lk_pad = -(-Lk // 128) * 128
    for t in (2048, 1024, 512, 256, 128):
        if lk_pad % t == 0 and usage(t, lk_pad) <= budget:
            return t, lk_pad
    return 128, lk_pad


# ---------------------------------------------------------------------------
# Kernel body.
# ---------------------------------------------------------------------------
def _sdpa_kernel(*refs, inv_temperature, has_mask, mask_resident, tlk,
                 return_attn, compute_dtype, exp_dtype, approx_reciprocal):
    # Ref layout: q, k, v, [mask], out, [attn], acc_scratch
    q_ref, k_ref, v_ref = refs[0], refs[1], refs[2]
    pos = 3
    mask_ref = None
    if has_mask:
        mask_ref = refs[pos]
        pos += 1
    out_ref = refs[pos]
    pos += 1
    attn_ref = refs[pos] if return_attn else None
    acc_ref = refs[-1]                                  # (Dv, Lq) f32 scratch

    kk = pl.program_id(1)

    @pl.when(kk == 0)
    def _():
        acc_ref[...] = jnp.zeros_like(acc_ref)

    q = q_ref[0]                                        # (Dk, Lq)  resident over kk
    # Fold 1/temperature into the k tile: per-tile work, no redundant rescale
    # of the kk-resident q block.
    k = k_ref[0] * inv_temperature                      # (Dk, TLk)
    v = v_ref[0]                                        # (Dv, TLk)

    if compute_dtype is not None:                       # bf16 MXU feed
        q = q.astype(compute_dtype)
        k = k.astype(compute_dtype)
        v = v.astype(compute_dtype)

    # logits = (k/temp)^T @ q -> (TLk, Lq); contraction over Dk (dim 0 of both
    # operands) without materializing a transpose of k; f32 accumulation.
    logits = lax.dot_general(
        k, q, (((0,), (0,)), ((), ())), preferred_element_type=jnp.float32
    )

    if has_mask:
        if mask_resident:
            start = pl.multiple_of(kk * tlk, tlk)
            m = mask_ref[0, 0, pl.ds(start, tlk), :]    # slice the resident mask
        else:
            m = mask_ref[0, 0]                          # streamed (TLk, Lq) int8
        logits = jnp.where(m == 0, jnp.float32(-1e9), logits)

    # Softmax over the last axis (Lq). Lk rows are independent, so tiling Lk
    # keeps the softmax exact and local to the tile.  Fully-masked rows yield
    # a uniform distribution over Lq (same as PyTorch masked_fill + softmax).
    logits = logits - jnp.max(logits, axis=-1, keepdims=True)
    if exp_dtype is not None:
        e = jnp.exp(logits.astype(exp_dtype)).astype(jnp.float32)
    else:
        e = jnp.exp(logits)
    denom = jnp.sum(e, axis=-1, keepdims=True)
    if approx_reciprocal:
        attn = e * pl.reciprocal(denom, approx=True)    # EUP slot, nearly free
    else:
        attn = e / denom                                # exact probabilities

    # TODO(synk): nn.Dropout(0.1) is identity in eval mode; train-mode dropout
    # would use pltpu.prng_seed / pltpu.prng_random_bits here.

    if return_attn:
        attn_ref[0] = attn.astype(attn_ref.dtype)

    # Accumulate output = v @ attn over the Lk tiles -> (Dv, Lq), f32 accum.
    acc_ref[...] += jnp.dot(
        v, attn.astype(v.dtype), preferred_element_type=jnp.float32
    )

    @pl.when(kk == pl.num_programs(1) - 1)
    def _():
        out_ref[0] = acc_ref[...].astype(out_ref.dtype)


# ---------------------------------------------------------------------------
# Wrapper.
# ---------------------------------------------------------------------------
def scaled_dot_product_attention(q, k, v, temperature, mask=None, *,
                                 return_attn=True,
                                 attn_dtype=jnp.bfloat16,
                                 use_bf16_matmul=True,
                                 use_bf16_exp=None,
                                 approx_reciprocal=True,
                                 transpose_output=True,
                                 key_tile=None):
    """q:(B,H,Dk,Lq)  k:(B,H,Dk,Lk)  v:(B,H,Dv,Lk)  mask broadcastable to (B,H,Lk,Lq).

    Returns (output, attn).  output is (B,H,Lq,Dv) (PyTorch layout) when
    transpose_output=True, else the kernel-native lane-dense (B,H,Dv,Lq).
    attn is (B,H,Lk,Lq) in `attn_dtype` (bf16 by default to halve writeback),
    or None when return_attn=False.  A mask with ndim < 4 is broadcast with
    trailing-dim alignment, exactly like PyTorch masked_fill broadcasting.
    Set approx_reciprocal=False if attn must be exact probabilities.
    """
    q = jnp.asarray(q)
    k = jnp.asarray(k)
    v = jnp.asarray(v)
    B, H, Dk, Lq = q.shape
    if k.shape[0] != B or k.shape[1] != H or k.shape[2] != Dk:
        raise ValueError("k must be (B, H, Dk, Lk) matching q")
    Lk = k.shape[3]
    Dv = v.shape[2]
    if v.shape != (B, H, Dv, Lk):
        raise ValueError("v must be (B, H, Dv, Lk)")

    in_itemsize = jnp.dtype(q.dtype).itemsize
    attn_dtype = jnp.dtype(attn_dtype) if attn_dtype is not None else jnp.dtype(q.dtype)
    attn_itemsize = attn_dtype.itemsize

    # Generation-aware VMEM budgeting.
    vmem_cap = _vmem_capacity_bytes()
    vmem_limit = int(vmem_cap * 0.8)          # headroom for compiler internals
    budget = int(vmem_limit * 0.85)           # headroom inside the limit

    # ---- mask preparation -------------------------------------------------
    has_mask = mask is not None
    mask_resident = False
    m = None
    Bm = Hm = 1
    if has_mask:
        m = jnp.asarray(mask)
        if m.ndim > 4:
            raise ValueError("mask rank must be <= 4")
        while m.ndim < 4:                     # trailing-aligned broadcast (== PyTorch)
            m = m[None]
        Bm, Hm = int(m.shape[0]), int(m.shape[1])
        if Bm not in (1, B) or Hm not in (1, H):
            raise ValueError("mask batch/head dims must be 1 or match q")
        # Only (Lk, Lq) broadcasting is materialized; batch/head broadcasting is
        # handled for free by residency or the index_map.  int8 cuts DMA 4x.
        m = jnp.broadcast_to(m, (Bm, Hm, Lk, Lq)).astype(jnp.int8)
        lk_pad128 = -(-Lk // 128) * 128
        mask_resident = (Bm == 1 and Hm == 1
                         and 2 * lk_pad128 * Lq <= budget // 4)

    # ---- Lk tiling / padding ----------------------------------------------
    TLk, Lk_pad = _plan_tiling(Lk, Lq, Dk, Dv, in_itemsize, attn_itemsize,
                               return_attn, has_mask, mask_resident, budget,
                               key_tile=key_tile)
    nk = Lk_pad // TLk

    if Lk_pad != Lk:
        pad = Lk_pad - Lk
        k = jnp.pad(k, ((0, 0), (0, 0), (0, 0), (0, pad)))
        # Zero-padded v columns contribute 0 to the output regardless of the
        # (arbitrary) softmax values of the padded rows.
        v = jnp.pad(v, ((0, 0), (0, 0), (0, 0), (0, pad)))
        if has_mask:
            m = jnp.pad(m, ((0, 0), (0, 0), (0, pad), (0, 0)), constant_values=1)

    # Collapse (B, H) -> BH: free reshape, single balanced "parallel" axis.
    BH = B * H
    q3 = q.reshape(BH, Dk, Lq)
    k3 = k.reshape(BH, Dk, Lk_pad)
    v3 = v.reshape(BH, Dv, Lk_pad)

    in_specs = [
        pl.BlockSpec((1, Dk, Lq), lambda bh, kk: (bh, 0, 0)),
        pl.BlockSpec((1, Dk, TLk), lambda bh, kk: (bh, 0, kk)),
        pl.BlockSpec((1, Dv, TLk), lambda bh, kk: (bh, 0, kk)),
    ]
    inputs = [q3, k3, v3]

    if has_mask:
        if mask_resident:
            # Constant block index -> fetched from HBM once for the whole grid.
            in_specs.append(
                pl.BlockSpec((1, 1, Lk_pad, Lq), lambda bh, kk: (0, 0, 0, 0)))
        else:
            def _mask_index_map(bh, kk, _Bm=Bm, _Hm=Hm, _H=H):
                b = bh // _H if _Bm > 1 else 0
                h = bh % _H if _Hm > 1 else 0
                return (b, h, kk, 0)
            in_specs.append(pl.BlockSpec((1, 1, TLk, Lq), _mask_index_map))
        inputs.append(m)

    # Lane-dense output layout (.., Dv, Lq): last dim Lq -> full-width stores.
    out_shapes = [jax.ShapeDtypeStruct((BH, Dv, Lq), q.dtype)]
    out_specs = [pl.BlockSpec((1, Dv, Lq), lambda bh, kk: (bh, 0, 0))]
    if return_attn:
        out_shapes.append(jax.ShapeDtypeStruct((BH, Lk_pad, Lq), attn_dtype))
        out_specs.append(pl.BlockSpec((1, TLk, Lq), lambda bh, kk: (bh, kk, 0)))

    # ---- dtype strategy -----------------------------------------------------
    compute_dtype = jnp.bfloat16 if (use_bf16_matmul and q.dtype == jnp.float32) else None
    if use_bf16_exp is None:
        use_bf16_exp = _default_bf16_exp()
    exp_dtype = jnp.bfloat16 if use_bf16_exp else None

    kernel = functools.partial(
        _sdpa_kernel,
        inv_temperature=1.0 / float(temperature),
        has_mask=has_mask,
        mask_resident=mask_resident,
        tlk=TLk,
        return_attn=return_attn,
        compute_dtype=compute_dtype,
        exp_dtype=exp_dtype,
        approx_reciprocal=approx_reciprocal,
    )

    grid_spec = pltpu.PrefetchScalarGridSpec(
        num_scalar_prefetch=0,
        grid=(BH, nk),
        in_specs=in_specs,
        out_specs=out_specs,
        scratch_shapes=[pltpu.VMEM((Dv, Lq), jnp.float32)],
    )

    results = pl.pallas_call(
        kernel,
        out_shape=tuple(out_shapes),
        grid_spec=grid_spec,
        compiler_params=pltpu.CompilerParams(
            dimension_semantics=("parallel", "arbitrary"),
            vmem_limit_bytes=vmem_limit,
        ),
    )(*inputs)

    if return_attn:
        out_raw, attn = results
    else:
        (out_raw,) = results
        attn = None

    out = out_raw.reshape(B, H, Dv, Lq)
    if transpose_output:
        out = jnp.swapaxes(out, 2, 3)            # PyTorch (B, H, Lq, Dv) layout
    if attn is not None:
        attn = attn.reshape(B, H, Lk_pad, Lq)
        if Lk_pad != Lk:
            attn = attn[:, :, :Lk, :]
    return out, attn


# ---------------------------------------------------------------------------
# Pure-JAX reference (high precision) for correctness checks.
# ---------------------------------------------------------------------------
def _reference(q, k, v, temperature, mask=None):
    attn = jnp.einsum("bhdk,bhdq->bhkq", k, q / temperature,
                      precision=lax.Precision.HIGHEST)
    if mask is not None:
        m = jnp.asarray(mask)
        while m.ndim < 4:
            m = m[None]
        attn = jnp.where(m == 0, -1e9, attn)
    attn = jax.nn.softmax(attn, axis=-1)
    out = jnp.einsum("bhdk,bhkq->bhdq", v, attn,
                     precision=lax.Precision.HIGHEST)
    return jnp.swapaxes(out, 2, 3), attn


if __name__ == "__main__":
    B, H, Dk, Dv, L = 2, 2, 16, 16, 8
    temperature = float(Dk) ** 0.5

    key = jax.random.PRNGKey(0)
    kq, kk_, kv, km = jax.random.split(key, 4)
    q = jax.random.normal(kq, (B, H, Dk, L), dtype=jnp.float32)
    k = jax.random.normal(kk_, (B, H, Dk, L), dtype=jnp.float32)
    v = jax.random.normal(kv, (B, H, Dv, L), dtype=jnp.float32)
    mask = (jax.random.uniform(km, (B, 1, L, L)) > 0.3).astype(jnp.int32)

    precise = dict(use_bf16_matmul=False, use_bf16_exp=False,
                   approx_reciprocal=False, attn_dtype=jnp.float32)

    # 1) no-mask, precise settings (f32 MXU, f32 exp, exact divide) -> tight check
    out, attn = scaled_dot_product_attention(q, k, v, temperature, mask=None, **precise)
    jax.block_until_ready((out, attn))
    ref_out, ref_attn = _reference(q, k, v, temperature, mask=None)
    assert out.shape == (B, H, L, Dv) and attn.shape == (B, H, L, L)
    assert jnp.allclose(out, ref_out, atol=2e-3, rtol=2e-3)
    assert jnp.allclose(attn, ref_attn, atol=2e-3, rtol=2e-3)

    # 2) no-mask, default fast path (bf16 MXU feed, bf16 attn, approx reciprocal)
    out_d, attn_d = scaled_dot_product_attention(q, k, v, temperature, mask=None)
    jax.block_until_ready((out_d, attn_d))
    assert attn_d.dtype == jnp.bfloat16
    assert jnp.allclose(out_d, ref_out, atol=1e-1, rtol=1e-1)
    assert jnp.allclose(attn_d.astype(jnp.float32), ref_attn, atol=5e-2, rtol=5e-2)

    # 3) masked (mask broadcast over heads -> streamed int8 mask), precise
    out_m, attn_m = scaled_dot_product_attention(q, k, v, temperature, mask=mask, **precise)
    jax.block_until_ready((out_m, attn_m))
    ref_out_m, ref_attn_m = _reference(q, k, v, temperature, mask=mask)
    assert jnp.allclose(out_m, ref_out_m, atol=2e-3, rtol=2e-3)
    assert jnp.allclose(attn_m, ref_attn_m, atol=2e-3, rtol=2e-3)

    # 4) masked, default fast path
    out_md, attn_md = scaled_dot_product_attention(q, k, v, temperature, mask=mask)
    jax.block_until_ready((out_md, attn_md))
    assert jnp.allclose(out_md, ref_out_m, atol=1e-1, rtol=1e-1)

    # 5) VMEM-resident 2-D mask + forced Lk tiling/padding (Lk=160 -> pad 256, TLk=128)
    B2, H2, Lq2, Lk2 = 1, 2, 8, 160
    kq2, kk2, kv2, km2 = jax.random.split(jax.random.PRNGKey(1), 4)
    q2 = jax.random.normal(kq2, (B2, H2, Dk, Lq2), dtype=jnp.float32)
    k2 = jax.random.normal(kk2, (B2, H2, Dk, Lk2), dtype=jnp.float32)
    v2 = jax.random.normal(kv2, (B2, H2, Dv, Lk2), dtype=jnp.float32)
    mask2 = (jax.random.uniform(km2, (Lk2, Lq2)) > 0.3).astype(jnp.int32)
    out2, attn2 = scaled_dot_product_attention(q2, k2, v2, temperature, mask=mask2,
                                               key_tile=128, **precise)
    jax.block_until_ready((out2, attn2))
    ref_out2, ref_attn2 = _reference(q2, k2, v2, temperature, mask=mask2)
    assert out2.shape == (B2, H2, Lq2, Dv) and attn2.shape == (B2, H2, Lk2, Lq2)
    assert jnp.allclose(out2, ref_out2, atol=2e-3, rtol=2e-3)
    assert jnp.allclose(attn2, ref_attn2, atol=2e-3, rtol=2e-3)

    # 6) return_attn=False + kernel-native (untransposed) output layout
    out_nr, attn_nr = scaled_dot_product_attention(
        q, k, v, temperature, mask=None, return_attn=False,
        transpose_output=False, **precise)
    jax.block_until_ready(out_nr)
    assert attn_nr is None and out_nr.shape == (B, H, Dv, L)
    assert jnp.allclose(jnp.swapaxes(out_nr, 2, 3), ref_out, atol=2e-3, rtol=2e-3)

    print("KERNEL_OK")
</pallas_src>

<mosaic_0001>
module attributes {stable_mosaic.version = 11 : i64} {
  func.func @_sdpa_kernel(%arg0: i32, %arg1: i32, %arg2: memref<1x16x8xf32, #tpu.memory_space<vmem>>, %arg3: memref<1x16x8xf32, #tpu.memory_space<vmem>>, %arg4: memref<1x16x8xf32, #tpu.memory_space<vmem>>, %arg5: memref<1x16x8xf32, #tpu.memory_space<vmem>>, %arg6: memref<1x8x8xf32, #tpu.memory_space<vmem>>, %arg7: memref<16x8xf32, #tpu.memory_space<vmem>>) attributes {dimension_semantics = [#tpu.dimension_semantics<parallel>, #tpu.dimension_semantics<arbitrary>], iteration_bounds = array<i64: 4, 1>, scalar_prefetch = 0 : i64, scratch_operands = 1 : i64, tpu.core_type = #tpu.core_type<tc>, window_params = [{transform_indices = @transform_0, window_bounds = array<i64: 1, 16, 8>}, {transform_indices = @transform_1, window_bounds = array<i64: 1, 16, 8>}, {transform_indices = @transform_2, window_bounds = array<i64: 1, 16, 8>}, {transform_indices = @transform_3, window_bounds = array<i64: 1, 16, 8>}, {transform_indices = @transform_4, window_bounds = array<i64: 1, 8, 8>}]} {
    %c0_i32 = arith.constant 0 : i32
    %0 = arith.cmpi eq, %arg1, %c0_i32 : i32
    %1 = arith.extui %0 : i1 to i32
    %c0_i32_0 = arith.constant 0 : i32
    %2 = arith.cmpi ne, %1, %c0_i32_0 : i32
    scf.if %2 {
      %cst_22 = arith.constant 0.000000e+00 : f32
      %31 = vector.broadcast %cst_22 : f32 to vector<16x8xf32>
      %c0_23 = arith.constant 0 : index
      %c0_24 = arith.constant 0 : index
      %32 = vector.load %arg7[%c0_23, %c0_24] : memref<16x8xf32, #tpu.memory_space<vmem>>, vector<16x8xf32>
      tpu.vector_store %arg7[%c0_23, %c0_24], %31 {strides = array<i32>} : memref<16x8xf32, #tpu.memory_space<vmem>>, vector<16x8xf32>,
    } else {
    }
    %c0 = arith.constant 0 : index
    %c0_1 = arith.constant 0 : index
    %c0_2 = arith.constant 0 : index
    %3 = vector.load %arg2[%c0, %c0_1, %c0_2] : memref<1x16x8xf32, #tpu.memory_space<vmem>>, vector<1x16x8xf32>
    %4 = vector.shape_cast %3 : vector<1x16x8xf32> to vector<16x8xf32>
    %c0_3 = arith.constant 0 : index
    %c0_4 = arith.constant 0 : index
    %c0_5 = arith.constant 0 : index
    %5 = vector.load %arg3[%c0_3, %c0_4, %c0_5] : memref<1x16x8xf32, #tpu.memory_space<vmem>>, vector<1x16x8xf32>
    %6 = vector.shape_cast %5 : vector<1x16x8xf32> to vector<16x8xf32>
    %cst = arith.constant 2.500000e-01 : f32
    %7 = vector.broadcast %cst : f32 to vector<16x8xf32>
    %8 = arith.mulf %6, %7 : vector<16x8xf32>
    %c0_6 = arith.constant 0 : index
    %c0_7 = arith.constant 0 : index
    %c0_8 = arith.constant 0 : index
    %9 = vector.load %arg4[%c0_6, %c0_7, %c0_8] : memref<1x16x8xf32, #tpu.memory_space<vmem>>, vector<1x16x8xf32>
    %10 = vector.shape_cast %9 : vector<1x16x8xf32> to vector<16x8xf32>
    %cst_9 = arith.constant dense<0.000000e+00> : vector<8x8xf32>
    %11 = tpu.matmul %8, %4, %cst_9 {dimension_numbers = #tpu.dot_dimension_numbers<[0], [0], [1], [1], [0, 1, 1, 1], [], []>} : vector<16x8xf32>, vector<16x8xf32>, vector<8x8xf32> -> vector<8x8xf32>
    %cst_10 = arith.constant dense<0xFF800000> : vector<8xf32>
    %12 = vector.multi_reduction <maximumf>, %11, %cst_10 [1] : vector<8x8xf32> to vector<8xf32>
    %13 = vector.shape_cast %12 : vector<8xf32> to vector<8x1xf32>
    %14 = vector.broadcast %13 : vector<8x1xf32> to vector<8x8xf32>
    %15 = arith.subf %11, %14 : vector<8x8xf32>
    %16 = math.exp %15 : vector<8x8xf32>
    %cst_11 = arith.constant dense<0.000000e+00> : vector<8xf32>
    %17 = vector.multi_reduction <add>, %16, %cst_11 [1] : vector<8x8xf32> to vector<8xf32>
    %18 = vector.shape_cast %17 : vector<8xf32> to vector<8x1xf32>
    %19 = vector.broadcast %18 : vector<8x1xf32> to vector<8x8xf32>
    %20 = arith.divf %16, %19 : vector<8x8xf32>
    %c0_12 = arith.constant 0 : index
    %c0_13 = arith.constant 0 : index
    %c0_14 = arith.constant 0 : index
    %21 = vector.load %arg6[%c0_12, %c0_13, %c0_14] : memref<1x8x8xf32, #tpu.memory_space<vmem>>, vector<1x8x8xf32>
    %22 = vector.shape_cast %21 : vector<1x8x8xf32> to vector<8x8xf32>
    %23 = vector.shape_cast %20 : vector<8x8xf32> to vector<1x8x8xf32>
    tpu.vector_store %arg6[%c0_12, %c0_13, %c0_14], %23 {strides = array<i32>} : memref<1x8x8xf32, #tpu.memory_space<vmem>>, vector<1x8x8xf32>,
    %c0_15 = arith.constant 0 : index
    %c0_16 = arith.constant 0 : index
    %24 = vector.load %arg7[%c0_15, %c0_16] : memref<16x8xf32, #tpu.memory_space<vmem>>, vector<16x8xf32>
    %cst_17 = arith.constant dense<0.000000e+00> : vector<16x8xf32>
    %25 = tpu.matmul %10, %20, %cst_17 {dimension_numbers = #tpu.dot_dimension_numbers<[1], [0], [0], [1], [0, 0, 1, 1], [], []>} : vector<16x8xf32>, vector<8x8xf32>, vector<16x8xf32> -> vector<16x8xf32>
    %26 = arith.addf %24, %25 : vector<16x8xf32>
    %c0_18 = arith.constant 0 : index
    %c0_19 = arith.constant 0 : index
    %27 = vector.load %arg7[%c0_18, %c0_19] : memref<16x8xf32, #tpu.memory_space<vmem>>, vector<16x8xf32>
    tpu.vector_store %arg7[%c0_18, %c0_19], %26 {strides = array<i32>} : memref<16x8xf32, #tpu.memory_space<vmem>>, vector<16x8xf32>,
    %c0_i32_20 = arith.constant 0 : i32
    %28 = arith.cmpi eq, %arg1, %c0_i32_20 : i32
    %29 = arith.extui %28 : i1 to i32
    %c0_i32_21 = arith.constant 0 : i32
    %30 = arith.cmpi ne, %29, %c0_i32_21 : i32
    scf.if %30 {
      %c0_22 = arith.constant 0 : index
      %c0_23 = arith.constant 0 : index
      %31 = vector.load %arg7[%c0_22, %c0_23] : memref<16x8xf32, #tpu.memory_space<vmem>>, vector<16x8xf32>
      %c0_24 = arith.constant 0 : index
      %c0_25 = arith.constant 0 : index
      %c0_26 = arith.constant 0 : index
      %32 = vector.load %arg5[%c0_24, %c0_25, %c0_26] : memref<1x16x8xf32, #tpu.memory_space<vmem>>, vector<1x16x8xf32>
      %33 = vector.shape_cast %32 : vector<1x16x8xf32> to vector<16x8xf32>
      %34 = vector.shape_cast %31 : vector<16x8xf32> to vector<1x16x8xf32>
      tpu.vector_store %arg5[%c0_24, %c0_25, %c0_26], %34 {strides = array<i32>} : memref<1x16x8xf32, #tpu.memory_space<vmem>>, vector<1x16x8xf32>,
    } else {
    }
    return
  }
  func.func @transform_0(%arg0: i32, %arg1: i32) -> (i32, i32, i32) {
    %c0_i32 = arith.constant 0 : i32
    %c0_i32_0 = arith.constant 0 : i32
    %c0_i32_1 = arith.constant 0 : i32
    return %arg0, %c0_i32, %c0_i32_0 : i32, i32, i32
  }
  func.func @transform_1(%arg0: i32, %arg1: i32) -> (i32, i32, i32) {
    %c0_i32 = arith.constant 0 : i32
    %c0_i32_0 = arith.constant 0 : i32
    return %arg0, %c0_i32, %arg1 : i32, i32, i32
  }
  func.func @transform_2(%arg0: i32, %arg1: i32) -> (i32, i32, i32) {
    %c0_i32 = arith.constant 0 : i32
    %c0_i32_0 = arith.constant 0 : i32
    return %arg0, %c0_i32, %arg1 : i32, i32, i32
  }
  func.func @transform_3(%arg0: i32, %arg1: i32) -> (i32, i32, i32) {
    %c0_i32 = arith.constant 0 : i32
    %c0_i32_0 = arith.constant 0 : i32
    %c0_i32_1 = arith.constant 0 : i32
    return %arg0, %c0_i32, %c0_i32_0 : i32, i32, i32
  }
  func.func @transform_4(%arg0: i32, %arg1: i32) -> (i32, i32, i32) {
    %c0_i32 = arith.constant 0 : i32
    %c0_i32_0 = arith.constant 0 : i32
    return %arg0, %arg1, %c0_i32 : i32, i32, i32
  }
}

</mosaic_0001>

<llo_original>
// kernel: tpu_custom_call.1
$region0: #{tpu_custom_call.1}
  #allocation0 [shape = 'u32[]', space=smem, size = 0x4, offset = 0x4, fixed_abs, tag = 'smem constant byte address 0x4 - core index']
  #allocation1 [shape = 'u32[144,128]{1,0:T(1,128)}', space=vmem, size = 0x12000, scoped, tag = 'internal scratch']
  #allocation2 [shape = 'f32[16,8]{1,0:T(8,128)}', space=vmem, size = 0x2000, scoped, tag = 'scratch operand']
  %s0 = inlined_call_operand.vmem [shape: f32[4,16,8], index: 0, kind: input, shape index: {}]
  %s1 = inlined_call_operand.vmem [shape: f32[4,16,8], index: 1, kind: input, shape index: {}]
  %s2 = inlined_call_operand.vmem [shape: f32[4,16,8], index: 2, kind: input, shape index: {}]
  %s3 = inlined_call_operand.vmem [shape: f32[4,16,8], index: 3, kind: output, shape index: {0}]
  %s4 = inlined_call_operand.hbm [shape: f32[4,8,8], index: 4, kind: output, shape index: {1}]
  %5 = xla_tuple %s3, %s4
  %s6 = sld [smem:[#allocation0]]
  $region61: #{tpu_custom_call.1} parent=0
    _
  %s8 = ssub.s32 1, %s6
  %s9 = scalar_select 0, %s8, %s6
  $region1: #{tpu_custom_call.1} parent=0
    #allocation3 [shape = 'u8[8192]{0}', space=vmem, size = 0x2000, scoped, tag = 'output window, operand 1']
    #allocation4 [shape = 's32[2]{0}', space=sflag, size = 0x8, scoped, tag = 'scoped memory for tpu_custom_call.1']
    %10 = vsyncpa [#allocation4], 0
    %s11 = scalar_lea.sflag [#allocation4], 1
    %12 = vsyncpa %s11, 0
    loop: start=0, step=1, limit=6
    $region2: #{tpu_custom_call.1} parent=1 // loop_pre_header
      _
    $region3: #{tpu_custom_call.1} parent=1 // loop_header
      %s14 = sphi 0, %s18
      %p15 = scmp.ge.s32.totalorder %s14, 6
      %s21 = sphi 0, %s33
      %s22 = sphi 0, %s29
      %s23 = sphi 0, %s21
      %s24 = sphi 0, %s22
      %s25 = sphi 0, %s23
      %s26 = sphi 0, %s24
      %s36 = sphi 0, %s38
      %s39 = sphi 0, %s36
      %s40 = sphi 0, %s39
      %s56 = sphi 0, %s40
      %s64 = sphi 0, %s66
      %s67 = sphi 0, %s64
      %s68 = sphi 0, %s67
      %s84 = sphi 0, %s68
      %s92 = sphi 0, %s94
      %s95 = sphi 0, %s92
      %s96 = sphi 0, %s95
      %s112 = sphi 0, %s96
      %s118 = sphi 0, %s120
      %s121 = sphi 0, %s118
      %s122 = sphi 0, %s121
      %s138 = sphi 0, %s122
      %s146 = sphi 0, %s148
      %s149 = sphi 0, %s146
      %s150 = sphi 0, %s149
      %s166 = sphi 0, %s150
    $region4: #{tpu_custom_call.1} parent=1 // loop_header_branch
      %17 = sbr.rel (%p15) target = $region8
    $region5: #{tpu_custom_call.1} parent=1 // loop_body
      %s19 = ssub.s32 %s14, 1
      %s20 = ssub.s32 %s14, 2
      %s27 = sadd.s32 1, %s22
      %p28 = scmp.ge.s32.totalorder %s27, 1
      %s29 = scalar_select %p28, 0, %s27
      %s30 = sadd.s32 1, %s21
      %s31 = scalar_select %p28, %s30, %s21
      %p32 = scmp.ge.s32.totalorder %s31, 4
      %s33 = scalar_select %p32, 0, %s31
      %s34 = ssub.s32 %s21, %s33
      %p35 = scmp.eq.s32.totalorder %s34, 0
      %s37 = sadd.s32 %s36, 1
      %s38 = scalar_select %p35, %s36, %s37
      %p41 = pneg %p35
      %p42 = scmp.eq.s32.totalorder %s14, 3
      %p43 = por %p41, %p42
      %p44 = scmp.ne.s32.totalorder %s36, %s39
      %p45 = scmp.eq.s32.totalorder %s14, 0
      %p46 = por %p44, %p45
      %p47 = scmp.ne.s32.totalorder %s36, %s39
      %p48 = scmp.eq.s32.totalorder %s19, 3
      %p49 = por %p47, %p48
      %p50 = scmp.ne.s32.totalorder %s39, %s40
      %p51 = scmp.eq.s32.totalorder %s19, 0
      %p52 = por %p50, %p51
      %p53 = scmp.ne.s32.totalorder %s39, %s40
      %p54 = scmp.eq.s32.totalorder %s20, 3
      %p55 = por %p53, %p54
      %p57 = scmp.ne.s32.totalorder %s40, %s56
      %p58 = scmp.eq.s32.totalorder %s20, 0
      %p59 = por %p57, %p58
      %s60 = ssub.s32 %s21, %s33
      %s61 = ssub.s32 %s22, %s29
      %s62 = sor.u32 %s60, %s61
      %p63 = scmp.eq.s32.totalorder %s62, 0
      %s65 = sadd.s32 %s64, 1
      %s66 = scalar_select %p63, %s64, %s65
      %p69 = pneg %p63
      %p70 = scmp.eq.s32.totalorder %s14, 3
      %p71 = por %p69, %p70
      %p72 = scmp.ne.s32.totalorder %s64, %s67
      %p73 = scmp.eq.s32.totalorder %s14, 0
      %p74 = por %p72, %p73
      %p75 = scmp.ne.s32.totalorder %s64, %s67
      %p76 = scmp.eq.s32.totalorder %s19, 3
      %p77 = por %p75, %p76
      %p78 = scmp.ne.s32.totalorder %s67, %s68
      %p79 = scmp.eq.s32.totalorder %s19, 0
      %p80 = por %p78, %p79
      %p81 = scmp.ne.s32.totalorder %s67, %s68
      %p82 = scmp.eq.s32.totalorder %s20, 3
      %p83 = por %p81, %p82
      %p85 = scmp.ne.s32.totalorder %s68, %s84
      %p86 = scmp.eq.s32.totalorder %s20, 0
      %p87 = por %p85, %p86
      %s88 = ssub.s32 %s21, %s33
      %s89 = ssub.s32 %s22, %s29
      %s90 = sor.u32 %s88, %s89
      %p91 = scmp.eq.s32.totalorder %s90, 0
      %s93 = sadd.s32 %s92, 1
      %s94 = scalar_select %p91, %s92, %s93
      %p97 = pneg %p91
      %p98 = scmp.eq.s32.totalorder %s14, 3
      %p99 = por %p97, %p98
      %p100 = scmp.ne.s32.totalorder %s92, %s95
      %p101 = scmp.eq.s32.totalorder %s14, 0
      %p102 = por %p100, %p101
      %p103 = scmp.ne.s32.totalorder %s92, %s95
      %p104 = scmp.eq.s32.totalorder %s19, 3
      %p105 = por %p103, %p104
      %p106 = scmp.ne.s32.totalorder %s95, %s96
      %p107 = scmp.eq.s32.totalorder %s19, 0
      %p108 = por %p106, %p107
      %p109 = scmp.ne.s32.totalorder %s95, %s96
      %p110 = scmp.eq.s32.totalorder %s20, 3
      %p111 = por %p109, %p110
      %p113 = scmp.ne.s32.totalorder %s96, %s112
      %p114 = scmp.eq.s32.totalorder %s20, 0
      %p115 = por %p113, %p114
      %s116 = ssub.s32 %s21, %s33
      %p117 = scmp.eq.s32.totalorder %s116, 0
      %s119 = sadd.s32 %s118, 1
      %s120 = scalar_select %p117, %s118, %s119
      %p123 = pneg %p117
      %p124 = scmp.eq.s32.totalorder %s14, 3
      %p125 = por %p123, %p124
      %p126 = scmp.ne.s32.totalorder %s118, %s121
      %p127 = scmp.eq.s32.totalorder %s14, 0
      %p128 = por %p126, %p127
      %p129 = scmp.ne.s32.totalorder %s118, %s121
      %p130 = scmp.eq.s32.totalorder %s19, 3
      %p131 = por %p129, %p130
      %p132 = scmp.ne.s32.totalorder %s121, %s122
      %p133 = scmp.eq.s32.totalorder %s19, 0
      %p134 = por %p132, %p133
      %p135 = scmp.ne.s32.totalorder %s121, %s122
      %p136 = scmp.eq.s32.totalorder %s20, 3
      %p137 = por %p135, %p136
      %p139 = scmp.ne.s32.totalorder %s122, %s138
      %p140 = scmp.eq.s32.totalorder %s20, 0
      %p141 = por %p139, %p140
      %s142 = ssub.s32 %s21, %s33
      %s143 = ssub.s32 %s22, %s29
      %s144 = sor.u32 %s142, %s143
      %p145 = scmp.eq.s32.totalorder %s144, 0
      %s147 = sadd.s32 %s146, 1
      %s148 = scalar_select %p145, %s146, %s147
      %p151 = pneg %p145
      %p152 = scmp.eq.s32.totalorder %s14, 3
      %p153 = por %p151, %p152
      %p154 = scmp.ne.s32.totalorder %s146, %s149
      %p155 = scmp.eq.s32.totalorder %s14, 0
      %p156 = por %p154, %p155
      %p157 = scmp.ne.s32.totalorder %s146, %s149
      %p158 = scmp.eq.s32.totalorder %s19, 3
      %p159 = por %p157, %p158
      %p160 = scmp.ne.s32.totalorder %s149, %s150
      %p161 = scmp.eq.s32.totalorder %s19, 0
      %p162 = por %p160, %p161
      %p163 = scmp.ne.s32.totalorder %s149, %s150
      %p164 = scmp.eq.s32.totalorder %s20, 3
      %p165 = por %p163, %p164
      %p167 = scmp.ne.s32.totalorder %s150, %s166
      %p168 = scmp.eq.s32.totalorder %s20, 0
      %p169 = por %p167, %p168
      %p170 = scmp.le.s32.totalorder 1, %s14
      %p171 = scmp.lt.s32.totalorder %s14, 5
      %p172 = pnand %p170, %p171
      %p173 = pneg %p172
      // Predicated region
      $region9: #{tpu_custom_call.1} parent=5 // pred_check
        _
      $region10: #{tpu_custom_call.1} parent=5 // pred_check_branch
        %175 = sbr.rel (%p172) target = $region12
      $region11: #{tpu_custom_call.1} parent=5 // pred_region
        %s176 = ssub.s32 %s14, 1
      $region12: #{tpu_custom_call.1} parent=5 // pred_fallthru
        _
      %p177 = scmp.lt.s32.totalorder %s14, 4
      // Predicated region
      $region13: #{tpu_custom_call.1} parent=5 // pred_check
        %p178 = pneg %p177
      $region14: #{tpu_custom_call.1} parent=5 // pred_check_branch
        %180 = sbr.rel (%p178) target = $region16
      $region15: #{tpu_custom_call.1} parent=5 // pred_region
        // Predicated region
        $region17: #{tpu_custom_call.1} parent=15 // pred_check
          %p181 = pneg %p46
        $region18: #{tpu_custom_call.1} parent=15 // pred_check_branch
          %183 = sbr.rel (%p181) target = $region20
        $region19: #{tpu_custom_call.1} parent=15 // pred_region
          %p184 = scmp.lt.s32.totalorder %s21, 3
          %s185 = scalar_select %p184, %s21, 3
          %s186 = smul.addr %s185, 2
          %s187 = smul.addr %s186, 8
          %s188 = scalar_lea.vmem %s0, %s187
        $region20: #{tpu_custom_call.1} parent=15 // pred_fallthru
          _
        // Predicated region
        $region21: #{tpu_custom_call.1} parent=15 // pred_check
          %p189 = pneg %p74
        $region22: #{tpu_custom_call.1} parent=15 // pred_check_branch
          %191 = sbr.rel (%p189) target = $region24
        $region23: #{tpu_custom_call.1} parent=15 // pred_region
          %p192 = scmp.lt.s32.totalorder %s21, 3
          %s193 = scalar_select %p192, %s21, 3
          %p194 = scmp.lt.s32.totalorder %s22, 0
          %s195 = scalar_select %p194, %s22, 0
          %s196 = smul.addr %s193, 2
          %s197 = sadd.s32 %s195, %s196
          %s198 = smul.addr %s197, 8
          %s199 = scalar_lea.vmem %s1, %s198
        $region24: #{tpu_custom_call.1} parent=15 // pred_fallthru
          _
        // Predicated region
        $region25: #{tpu_custom_call.1} parent=15 // pred_check
          %p200 = pneg %p102
        $region26: #{tpu_custom_call.1} parent=15 // pred_check_branch
          %202 = sbr.rel (%p200) target = $region28
        $region27: #{tpu_custom_call.1} parent=15 // pred_region
          %p203 = scmp.lt.s32.totalorder %s21, 3
          %s204 = scalar_select %p203, %s21, 3
          %p205 = scmp.lt.s32.totalorder %s22, 0
          %s206 = scalar_select %p205, %s22, 0
          %s207 = smul.addr %s204, 2
          %s208 = sadd.s32 %s206, %s207
          %s209 = smul.addr %s208, 8
          %s210 = scalar_lea.vmem %s2, %s209
        $region28: #{tpu_custom_call.1} parent=15 // pred_fallthru
          _
      $region16: #{tpu_custom_call.1} parent=5 // pred_fallthru
        _
      %p211 = scmp.le.s32.totalorder 1, %s14
      %p212 = scmp.lt.s32.totalorder %s14, 5
      %p213 = pnand %p211, %p212
      %p214 = pneg %p213
      // Predicated region
      $region29: #{tpu_custom_call.1} parent=5 // pred_check
        _
      $region30: #{tpu_custom_call.1} parent=5 // pred_check_branch
        %216 = sbr.rel (%p213) target = $region32
      $region31: #{tpu_custom_call.1} parent=5 // pred_region
        %s217 = ssub.s32 %s14, 1
        %p218 = scmp.lt.s32.totalorder %s23, 3
        %s219 = scalar_select %p218, %s23, 3
        %s220 = smul.addr %s219, 2
        %s221 = smul.addr %s220, 8
        %s222 = scalar_lea.vmem %s0, %s221
        %p223 = pneg %p52
        %p224 = pneg %p49
        %p225 = scmp.lt.s32.totalorder %s23, 3
        %s226 = scalar_select %p225, %s23, 3
        %p227 = scmp.lt.s32.totalorder %s24, 0
        %s228 = scalar_select %p227, %s24, 0
        %s229 = smul.addr %s226, 2
        %s230 = sadd.s32 %s228, %s229
        %s231 = smul.addr %s230, 8
        %s232 = scalar_lea.vmem %s1, %s231
        %p233 = pneg %p80
        %p234 = pneg %p77
        %p235 = scmp.lt.s32.totalorder %s23, 3
        %s236 = scalar_select %p235, %s23, 3
        %p237 = scmp.lt.s32.totalorder %s24, 0
        %s238 = scalar_select %p237, %s24, 0
        %s239 = smul.addr %s236, 2
        %s240 = sadd.s32 %s238, %s239
        %s241 = smul.addr %s240, 8
        %s242 = scalar_lea.vmem %s2, %s241
        %p243 = pneg %p108
        %p244 = pneg %p105
        %p245 = pneg %p134
        %p246 = pneg %p131
        %p247 = scmp.lt.s32.totalorder %s23, 3
        %s248 = scalar_select %p247, %s23, 3
        %s249 = smul.addr %s248, 2
        %s250 = smul.addr %s249, 8
        %s251 = scalar_lea.vmem %s3, %s250
        %p252 = pneg %p162
        %p253 = pneg %p159
        %s254 = sand.u32 %s149, 1
        %s255 = scalar_lea.sflag [#allocation4], %s254
        %s256 = sand.u32 %s149, 1
        %s257 = smul.addr %s256, 8
        %s258 = scalar_lea.vmem [#allocation3], %s257
        %p259 = scmp.lt.s32.totalorder %s23, 3
        %s260 = scalar_select %p259, %s23, 3
        %s261 = smul.addr %s260, 2
        %s262 = smul.addr %s261, 8
        %s263 = scalar_lea.vmem %s0, %s262
        %p264 = scmp.lt.s32.totalorder %s23, 3
        %s265 = scalar_select %p264, %s23, 3
        %p266 = scmp.lt.s32.totalorder %s24, 0
        %s267 = scalar_select %p266, %s24, 0
        %s268 = smul.addr %s265, 2
        %s269 = sadd.s32 %s267, %s268
        %s270 = smul.addr %s269, 8
        %s271 = scalar_lea.vmem %s1, %s270
        %p272 = scmp.lt.s32.totalorder %s23, 3
        %s273 = scalar_select %p272, %s23, 3
        %p274 = scmp.lt.s32.totalorder %s24, 0
        %s275 = scalar_select %p274, %s24, 0
        %s276 = smul.addr %s273, 2
        %s277 = sadd.s32 %s275, %s276
        %s278 = smul.addr %s277, 8
        %s279 = scalar_lea.vmem %s2, %s278
        %p280 = scmp.lt.s32.totalorder %s23, 3
        %s281 = scalar_select %p280, %s23, 3
        %s282 = smul.addr %s281, 2
        %s283 = smul.addr %s282, 8
        %s284 = scalar_lea.vmem %s3, %s283
        %p285 = scmp.eq.s32.totalorder %s24, 0
        // Predicated region
        $region33: #{tpu_custom_call.1} parent=31 // pred_check
          %p286 = pneg %p285
        $region34: #{tpu_custom_call.1} parent=31 // pred_check_branch
          %288 = sbr.rel (%p286) target = $region36
        $region35: #{tpu_custom_call.1} parent=31 // pred_region
          %vm289 = vcmask 64512
          %290 = vst.msk [vmem:[#allocation2] sm:$0xff] %vm289, 0.0
          %291 = vst.msk [vmem:[#allocation2 + $0x8] sm:$0xff] %vm289, 0.0
        $region36: #{tpu_custom_call.1} parent=31 // pred_fallthru
          _
        %v292 = vld [vmem:[%s263] sm:$0xff]
        %v293 = vld [vmem:[%s263 + $0x8] sm:$0xff]
        %v294 = vld [vmem:[%s271] sm:$0xff]
        %v295 = vld [vmem:[%s271 + $0x8] sm:$0xff]
        %v296 = vmul.f32 %v294, 0.25
        %v297 = vmul.f32 %v295, 0.25
        %v298 = vld [vmem:[%s279] sm:$0xff]
        %v299 = vld [vmem:[%s279 + $0x8] sm:$0xff]
        %300 = vxpose.xlu0.b32.start [1/16] %v296, 128
        %301 = vxpose.xlu0.b32.cont [2/16] %v297, 128
        %302 = vxpose.xlu0.b32.cont [3/16] 0.0, 128
        %303 = vxpose.xlu0.b32.cont [4/16] 0.0, 128
        %304 = vxpose.xlu0.b32.cont [5/16] 0.0, 128
        %305 = vxpose.xlu0.b32.cont [6/16] 0.0, 128
        %306 = vxpose.xlu0.b32.cont [7/16] 0.0, 128
        %307 = vxpose.xlu0.b32.cont [8/16] 0.0, 128
        %308 = vxpose.xlu0.b32.cont [9/16] 0.0, 128
        %309 = vxpose.xlu0.b32.cont [10/16] 0.0, 128
        %310 = vxpose.xlu0.b32.cont [11/16] 0.0, 128
        %311 = vxpose.xlu0.b32.cont [12/16] 0.0, 128
        %312 = vxpose.xlu0.b32.cont [13/16] 0.0, 128
        %313 = vxpose.xlu0.b32.cont [14/16] 0.0, 128
        %314 = vxpose.xlu0.b32.cont [15/16] 0.0, 128
        %315 = vxpose.xlu0.b32.end [16/16] 0.0, 128
        %v316 = vpop.trf.xlu0
        %v317 = vpop.trf.xlu0
        %v318 = vpop.trf.xlu0
        %v319 = vpop.trf.xlu0
        %v320 = vpop.trf.xlu0
        %v321 = vpop.trf.xlu0
        %v322 = vpop.trf.xlu0
        %v323 = vpop.trf.xlu0
        %v324 = vpop.trf.xlu0
        %v325 = vpop.trf.xlu0
        %v326 = vpop.trf.xlu0
        %v327 = vpop.trf.xlu0
        %v328 = vpop.trf.xlu0
        %v329 = vpop.trf.xlu0
        %v330 = vpop.trf.xlu0
        %v331 = vpop.trf.xlu0
        %vm332 = vcmask 130048
        %v334 = vsel %vm332, %v316, 0
        %336 = vmatprep.subr.mxu0 0.0
        %337 = vmatpush1.msra.mxu0 %v292
        %338 = vmatprep.subr.mxu0 0.0
        %339 = vmatpush1.msra.mxu0 %v293
        %340 = vmatprep.subr.mxu0 0.0
        %341 = vmatpush1.msra.mxu0 0.0
        %342 = vmatprep.subr.mxu0 0.0
        %343 = vmatpush1.msra.mxu0 0.0
        %344 = vmatprep.subr.mxu0 0.0
        %345 = vmatpush1.msra.mxu0 0.0
        %346 = vmatprep.subr.mxu0 0.0
        %347 = vmatpush1.msra.mxu0 0.0
        %348 = vmatprep.subr.mxu0 0.0
        %349 = vmatpush1.msra.mxu0 0.0
        %350 = vmatprep.subr.mxu0 0.0
        %351 = vmatpush1.msra.mxu0 0.0
        %352 = vmatprep.subr.mxu0 0.0
        %353 = vmatpush1.msra.mxu0 0.0
        %354 = vmatprep.subr.mxu0 0.0
        %355 = vmatpush1.msra.mxu0 0.0
        %356 = vmatprep.subr.mxu0 0.0
        %357 = vmatpush1.msra.mxu0 0.0
        %358 = vmatprep.subr.mxu0 0.0
        %359 = vmatpush1.msra.mxu0 0.0
        %360 = vmatprep.subr.mxu0 0.0
        %361 = vmatpush1.msra.mxu0 0.0
        %362 = vmatprep.subr.mxu0 0.0
        %363 = vmatpush1.msra.mxu0 0.0
        %364 = vmatprep.subr.mxu0 0.0
        %365 = vmatpush1.msra.mxu0 0.0
        %366 = vmatprep.subr.mxu0 0.0
        %367 = vmatpush1.msra.mxu0 0.0
        %368 = vmatprep.subr.mxu0 0.0
        %369 = vmatpush1.msra.mxu0 0.0
        %370 = vmatprep.subr.mxu0 0.0
        %371 = vmatpush1.msra.mxu0 0.0
        %372 = vmatprep.subr.mxu0 0.0
        %373 = vmatpush1.msra.mxu0 0.0
        %374 = vmatprep.subr.mxu0 0.0
        %375 = vmatpush1.msra.mxu0 0.0
        %376 = vmatprep.subr.mxu0 0.0
        %377 = vmatpush1.msra.mxu0 0.0
        %378 = vmatprep.subr.mxu0 0.0
        %379 = vmatpush1.msra.mxu0 0.0
        %380 = vmatprep.subr.mxu0 0.0
        %381 = vmatpush1.msra.mxu0 0.0
        %382 = vmatprep.subr.mxu0 0.0
        %383 = vmatpush1.msra.mxu0 0.0
        %384 = vmatprep.subr.mxu0 0.0
        %385 = vmatpush1.msra.mxu0 0.0
        %386 = vmatprep.subr.mxu0 0.0
        %387 = vmatpush1.msra.mxu0 0.0
        %388 = vmatprep.subr.mxu0 0.0
        %389 = vmatpush1.msra.mxu0 0.0
        %390 = vmatprep.subr.mxu0 0.0
        %391 = vmatpush1.msra.mxu0 0.0
        %392 = vmatprep.subr.mxu0 0.0
        %393 = vmatpush1.msra.mxu0 0.0
        %394 = vmatprep.subr.mxu0 0.0
        %395 = vmatpush1.msra.mxu0 0.0
        %396 = vmatprep.subr.mxu0 0.0
        %397 = vmatpush1.msra.mxu0 0.0
        %398 = vmatprep.subr.mxu0 0.0
        %399 = vmatpush1.msra.mxu0 0.0
        %400 = vmatprep.mubr.f32.mxu0 0.0
        %401 = vmatmul.mubr.f32.gmra.mrb[0].mxu0 %v334
        %v402 = vpop.f32.mrb[0].mxu0
        %v403 = vadd.f32 0.0, %v402
        %v404 = vpop.f32.mrb[0].mxu0
        %405 = vdwg.mxu0
        %vm406 = vcmask 64512
        %v407 = vsel %vm406, %v403, -inf
        %408 = vmax.xlane.f32.xlu0 %v407
        %v409 = vpop.xlane.xlu0 %408
        %v410 = vsub.f32 %v403, %v409
        %v411 = vmul.f32 %v410, 1.442695
        %v412 = vpow.pop %v411
        %v413 = vsel %vm406, %v412, 0.0
        %414 = vadd.xlane.f32.xlu0 %v413
        %v415 = vpop.xlane.xlu0 %414
        %v416 = vrcp.pop %v415
        %v417 = vmul.f32 %v412, %v416
        %418 = vst.msk [vmem:[%s258] sm:$0xff] %vm406, %v417
        %v419 = vld [vmem:[#allocation2] sm:$0xff]
        %v420 = vld [vmem:[#allocation2 + $0x8] sm:$0xff]
        %v422 = vsel %vm406, %v298, 0
        %v425 = vsel %vm406, %v299, 0
        %427 = vmatprep.subr.mxu0 0.0
        %428 = vmatpush1.msra.mxu0 %v417
        %429 = vmatprep.subr.mxu0 0.0
        %430 = vmatpush1.msra.mxu0 0.0
        %431 = vmatprep.subr.mxu0 0.0
        %432 = vmatpush1.msra.mxu0 0.0
        %433 = vmatprep.subr.mxu0 0.0
        %434 = vmatpush1.msra.mxu0 0.0
        %435 = vmatprep.subr.mxu0 0.0
        %436 = vmatpush1.msra.mxu0 0.0
        %437 = vmatprep.subr.mxu0 0.0
        %438 = vmatpush1.msra.mxu0 0.0
        %439 = vmatprep.subr.mxu0 0.0
        %440 = vmatpush1.msra.mxu0 0.0
        %441 = vmatprep.subr.mxu0 0.0
        %442 = vmatpush1.msra.mxu0 0.0
        %443 = vmatprep.subr.mxu0 0.0
        %444 = vmatpush1.msra.mxu0 0.0
        %445 = vmatprep.subr.mxu0 0.0
        %446 = vmatpush1.msra.mxu0 0.0
        %447 = vmatprep.subr.mxu0 0.0
        %448 = vmatpush1.msra.mxu0 0.0
        %449 = vmatprep.subr.mxu0 0.0
        %450 = vmatpush1.msra.mxu0 0.0
        %451 = vmatprep.subr.mxu0 0.0
        %452 = vmatpush1.msra.mxu0 0.0
        %453 = vmatprep.subr.mxu0 0.0
        %454 = vmatpush1.msra.mxu0 0.0
        %455 = vmatprep.subr.mxu0 0.0
        %456 = vmatpush1.msra.mxu0 0.0
        %457 = vmatprep.subr.mxu0 0.0
        %458 = vmatpush1.msra.mxu0 0.0
        %459 = vmatprep.subr.mxu0 0.0
        %460 = vmatpush1.msra.mxu0 0.0
        %461 = vmatprep.subr.mxu0 0.0
        %462 = vmatpush1.msra.mxu0 0.0
        %463 = vmatprep.subr.mxu0 0.0
        %464 = vmatpush1.msra.mxu0 0.0
        %465 = vmatprep.subr.mxu0 0.0
        %466 = vmatpush1.msra.mxu0 0.0
        %467 = vmatprep.subr.mxu0 0.0
        %468 = vmatpush1.msra.mxu0 0.0
        %469 = vmatprep.subr.mxu0 0.0
        %470 = vmatpush1.msra.mxu0 0.0
        %471 = vmatprep.subr.mxu0 0.0
        %472 = vmatpush1.msra.mxu0 0.0
        %473 = vmatprep.subr.mxu0 0.0
        %474 = vmatpush1.msra.mxu0 0.0
        %475 = vmatprep.subr.mxu0 0.0
        %476 = vmatpush1.msra.mxu0 0.0
        %477 = vmatprep.subr.mxu0 0.0
        %478 = vmatpush1.msra.mxu0 0.0
        %479 = vmatprep.subr.mxu0 0.0
        %480 = vmatpush1.msra.mxu0 0.0
        %481 = vmatprep.subr.mxu0 0.0
        %482 = vmatpush1.msra.mxu0 0.0
        %483 = vmatprep.subr.mxu0 0.0
        %484 = vmatpush1.msra.mxu0 0.0
        %485 = vmatprep.subr.mxu0 0.0
        %486 = vmatpush1.msra.mxu0 0.0
        %487 = vmatprep.subr.mxu0 0.0
        %488 = vmatpush1.msra.mxu0 0.0
        %489 = vmatprep.subr.mxu0 0.0
        %490 = vmatpush1.msra.mxu0 0.0
        %491 = vmatprep.mubr.f32.mxu0 0.0
        %492 = vmatmul.mubr.f32.gmra.mrb[0].mxu0 %v422
        %v493 = vpop.f32.mrb[0].mxu0
        %v494 = vadd.f32 0.0, %v493
        %v495 = vpop.f32.mrb[0].mxu0
        %496 = vmatprep.mubr.f32.mxu0 0.0
        %497 = vmatmul.mubr.f32.gmra.mrb[0].mxu0 %v425
        %v498 = vpop.f32.mrb[0].mxu0
        %v499 = vadd.f32 0.0, %v498
        %v500 = vpop.f32.mrb[0].mxu0
        %501 = vdwg.mxu0
        %v502 = vadd.f32 %v419, %v494
        %v503 = vadd.f32 %v420, %v499
        %504 = vst.msk [vmem:[#allocation2] sm:$0xff] %vm406, %v502
        %505 = vst.msk [vmem:[#allocation2 + $0x8] sm:$0xff] %vm406, %v503
        // Predicated region
        $region37: #{tpu_custom_call.1} parent=31 // pred_check
          %p506 = pneg %p285
        $region38: #{tpu_custom_call.1} parent=31 // pred_check_branch
          %508 = sbr.rel (%p506) target = $region40
        $region39: #{tpu_custom_call.1} parent=31 // pred_region
          %v509 = vld [vmem:[#allocation2] sm:$0xff]
          %v510 = vld [vmem:[#allocation2 + $0x8] sm:$0xff]
          %511 = vst.msk [vmem:[%s284] sm:$0xff] %vm406, %v509
          %512 = vst.msk [vmem:[%s284 + $0x8] sm:$0xff] %vm406, %v510
        $region40: #{tpu_custom_call.1} parent=31 // pred_fallthru
          _
        %p513 = scmp.lt.s32.totalorder %s23, 3
        %s514 = scalar_select %p513, %s23, 3
        %s515 = smul.addr %s514, 2
        %s516 = smul.addr %s515, 8
        %s517 = scalar_lea.vmem %s3, %s516
        %s518 = sand.u32 %s149, 1
        %s519 = scalar_lea.sflag [#allocation4], %s518
        %s520 = sand.u32 %s149, 1
        %s521 = smul.addr %s520, 8
        %s522 = scalar_lea.vmem [#allocation3], %s521
        // Predicated region
        $region41: #{tpu_custom_call.1} parent=31 // pred_check
          %p523 = pneg %p131
        $region42: #{tpu_custom_call.1} parent=31 // pred_check_branch
          %525 = sbr.rel (%p523) target = $region44
        $region43: #{tpu_custom_call.1} parent=31 // pred_region
          _
        $region44: #{tpu_custom_call.1} parent=31 // pred_fallthru
          _
        // Predicated region
        $region45: #{tpu_custom_call.1} parent=31 // pred_check
          %p526 = pneg %p159
        $region46: #{tpu_custom_call.1} parent=31 // pred_check_branch
          %528 = sbr.rel (%p526) target = $region48
        $region47: #{tpu_custom_call.1} parent=31 // pred_region
          %s530 = ssub.s32 128, 128
          %531 = vsyncadd %s519, %s530
          %s532 = sadd.s32 %s24, %s23
          %s533 = smul.addr %s532, 128
          %s534 = scalar_lea.hbm %s4, %s533
          %s536 = sshll.u32 %s522, 4
          %s537 = int_to_ptr.vmem [resolvable:$true] %s536
          %539 = dma.vmem_to_hbm [thread:$0]  %s537, 128, %s534, %s519
        $region48: #{tpu_custom_call.1} parent=31 // pred_fallthru
          _
      $region32: #{tpu_custom_call.1} parent=5 // pred_fallthru
        _
      %p540 = scmp.le.s32.totalorder 2, %s14
      // Predicated region
      $region49: #{tpu_custom_call.1} parent=5 // pred_check
        %p541 = pneg %p540
      $region50: #{tpu_custom_call.1} parent=5 // pred_check_branch
        %543 = sbr.rel (%p541) target = $region52
      $region51: #{tpu_custom_call.1} parent=5 // pred_region
        %s544 = ssub.s32 %s14, 2
        // Predicated region
        $region53: #{tpu_custom_call.1} parent=51 // pred_check
          %p545 = pneg %p137
        $region54: #{tpu_custom_call.1} parent=51 // pred_check_branch
          %547 = sbr.rel (%p545) target = $region56
        $region55: #{tpu_custom_call.1} parent=51 // pred_region
          %p548 = scmp.lt.s32.totalorder %s25, 3
          %s549 = scalar_select %p548, %s25, 3
          %s550 = smul.addr %s549, 2
          %s551 = smul.addr %s550, 8
          %s552 = scalar_lea.vmem %s3, %s551
        $region56: #{tpu_custom_call.1} parent=51 // pred_fallthru
          _
        // Predicated region
        $region57: #{tpu_custom_call.1} parent=51 // pred_check
          %p553 = pneg %p165
        $region58: #{tpu_custom_call.1} parent=51 // pred_check_branch
          %555 = sbr.rel (%p553) target = $region60
        $region59: #{tpu_custom_call.1} parent=51 // pred_region
          %s556 = sand.u32 %s150, 1
          %s557 = scalar_lea.sflag [#allocation4], %s556
          %s558 = sand.u32 %s150, 1
          %s559 = smul.addr %s558, 8
          %s560 = scalar_lea.vmem [#allocation3], %s559
          %561 = dma.done %s557, 128
        $region60: #{tpu_custom_call.1} parent=51 // pred_fallthru
          _
      $region52: #{tpu_custom_call.1} parent=5 // pred_fallthru
        _
    $region6: #{tpu_custom_call.1} parent=1 // loop_footer
      %s18 = sadd.s32 1, %s14
    $region7: #{tpu_custom_call.1} parent=1 // loop_footer_branch
      %13 = sbr.rel target = $region3
    $region8: #{tpu_custom_call.1} parent=1 // loop_exit
      _
    %562 = vsyncpa [#allocation4], 1
    %s563 = scalar_lea.sflag [#allocation4], 1
    %564 = vsyncpa %s563, 1

</llo_original>
